<compile_context>
chip_gen: v7x
topology: tpu7x:2x2x1
jax: 0.10.0
libtpu: 0.0.40
codegen_flags: <defaults>
</compile_context>

<pallas_src>
import functools

import jax
import jax.numpy as jnp
from jax import lax
from jax.experimental import pallas as pl
from jax.experimental.pallas import tpu as pltpu

_LANES = 128


def _channel_attention_kernel(x_ref, w1t_ref, w2t_ref, o_ref, sum_ref, max_ref,
                              *, hw_true, hw_tile, n_hw, needs_mask):
    # x_ref:   (1, C, THW)  lane-dense spatial chunk of one batch element
    #                       (native dtype; ragged tail lanes may hold garbage)
    # w1t_ref: (C, Cr)      first 1x1 conv weight, pre-transposed (f32)
    # w2t_ref: (Cr, C)      second 1x1 conv weight, pre-transposed (f32)
    # o_ref:   (1, 1, C)    sigmoid(MLP(avg) + MLP(max)), lane-dense in C
    # sum_ref / max_ref: (C, 1) f32 running spatial sum / max accumulators
    hw_step = pl.program_id(1)
    last = n_hw - 1

    @pl.when(hw_step == 0)
    def _init():
        sum_ref[...] = jnp.zeros_like(sum_ref)
        max_ref[...] = jnp.full_like(max_ref, -jnp.inf)

    def _accumulate(masked):
        # Cast per-chunk to f32 (input streams HBM in native dtype).
        xf = x_ref[0].astype(jnp.float32)                     # (C, THW)
        if masked:
            # Only the last chunk can be ragged; its valid-lane count is static.
            rem = hw_true - last * hw_tile
            lane = lax.broadcasted_iota(jnp.int32, (1, hw_tile), 1)
            valid = lane < rem                                # (1, THW) -> bcast C
            x_sum = jnp.where(valid, xf, 0.0)
            x_max = jnp.where(valid, xf, -jnp.inf)
        else:
            x_sum = xf
            x_max = xf
        sum_ref[...] = sum_ref[...] + jnp.sum(x_sum, axis=1, keepdims=True)
        max_ref[...] = jnp.maximum(max_ref[...],
                                   jnp.max(x_max, axis=1, keepdims=True))

    if needs_mask:
        # Fast (unmasked) path for all full chunks ...
        @pl.when(hw_step < last)
        def _fast():
            _accumulate(masked=False)

        # ... masking only on the ragged trailing chunk.
        @pl.when(hw_step == last)
        def _tail():
            _accumulate(masked=True)
    else:
        _accumulate(masked=False)

    @pl.when(hw_step == last)
    def _finalize():
        avg = sum_ref[...] * (1.0 / float(hw_true))            # (C, 1)
        pooled = jnp.concatenate([avg, max_ref[...]], axis=1)  # (C, 2)
        pooled_t = pooled.T                                    # (2, C) tiny
        # Shared MLP applied to avg & max rows at once (two matmuls total).
        h = jnp.maximum(
            jnp.dot(pooled_t, w1t_ref[...],
                    preferred_element_type=jnp.float32), 0.0)  # (2, Cr)
        out2 = jnp.dot(h, w2t_ref[...],
                       preferred_element_type=jnp.float32)     # (2, C)
        s = out2[0:1, :] + out2[1:2, :]                        # (1, C)
        o_ref[0] = jax.nn.sigmoid(s).astype(o_ref.dtype)


def channel_attention(x, w1, w2, *, target_block_bytes=None):
    """x: (B, C, H, W) any float dtype; w1: (C//r, C); w2: (C, C//r) -> (B, C, 1, 1)."""
    B, C, H, W = x.shape
    Cr = w1.shape[0]
    HW = H * W

    # Stream x in its native dtype; no padding, no upcast copies through HBM.
    x_flat = x.reshape(B, C, HW)
    esize = int(jnp.dtype(x_flat.dtype).itemsize)

    # Generation-aware sizing (v5e/v6e: 128 MiB VMEM, v7x: 64 MiB per TC).
    try:
        vmem_cap = int(pltpu.get_tpu_info().vmem_capacity_bytes)
    except Exception:
        vmem_cap = 64 * 1024 * 1024   # conservative fallback (v7x per-TC)

    if target_block_bytes is None:
        # Budget is for the f32 working set of one chunk; >= the ~1-4 MiB
        # HBM-roofline plateau, well inside every generation's VMEM.
        target_block_bytes = max(1 * 1024 * 1024,
                                 min(vmem_cap // 16, 8 * 1024 * 1024))

    # Lane-dense chunking of the spatial axis: THW multiple of 128.
    hw_rounded = int(pl.cdiv(HW, _LANES)) * _LANES
    max_lanes = max(_LANES, (target_block_bytes // (C * 4)) // _LANES * _LANES)
    thw = int(min(hw_rounded, max_lanes))
    n_hw = int(pl.cdiv(HW, thw))                 # non-dividing tail allowed
    needs_mask = (n_hw * thw != HW)

    # Pre-transpose the tiny 1x1-conv weights so in-kernel matmuls are
    # canonical and lane-dense in their outputs.
    w1_t = jnp.transpose(w1).astype(jnp.float32)   # (C, Cr)
    w2_t = jnp.transpose(w2).astype(jnp.float32)   # (Cr, C)

    kernel = functools.partial(
        _channel_attention_kernel,
        hw_true=HW, hw_tile=thw, n_hw=n_hw, needs_mask=needs_mask)

    cost = pl.CostEstimate(
        flops=2 * B * C * HW + 8 * B * C * Cr,
        transcendentals=B * C,
        bytes_accessed=B * C * HW * esize + 2 * C * Cr * 4 + B * C * 4)

    vmem_limit = int(min(vmem_cap * 3 // 4, 64 * 1024 * 1024))

    out = pl.pallas_call(
        kernel,
        out_shape=jax.ShapeDtypeStruct((B, 1, C), jnp.float32),
        grid_spec=pltpu.PrefetchScalarGridSpec(
            num_scalar_prefetch=0,
            grid=(B, n_hw),
            in_specs=[
                pl.BlockSpec((1, C, thw), lambda b, h: (b, 0, h)),
                pl.BlockSpec((C, Cr), lambda b, h: (0, 0)),
                pl.BlockSpec((Cr, C), lambda b, h: (0, 0)),
            ],
            out_specs=pl.BlockSpec((1, 1, C), lambda b, h: (b, 0, 0)),
            scratch_shapes=[
                pltpu.VMEM((C, 1), jnp.float32),   # running spatial sum
                pltpu.VMEM((C, 1), jnp.float32),   # running spatial max
            ],
        ),
        compiler_params=pltpu.CompilerParams(
            dimension_semantics=("parallel", "arbitrary"),
            vmem_limit_bytes=vmem_limit,
        ),
        cost_estimate=cost,
    )(x_flat, w1_t, w2_t)

    return out.reshape(B, C, 1, 1)


def channel_attention_ref(x, w1, w2):
    """Pure-JAX reference mirroring the PyTorch forward (f32 accumulation)."""
    B, C, H, W = x.shape
    xf = x.reshape(B, C, -1).astype(jnp.float32)
    avg = jnp.mean(xf, axis=-1)                    # (B, C)
    mx = jnp.max(xf, axis=-1)                      # (B, C)

    def mlp(v):                                    # v: (B, C)
        h = jnp.maximum(v @ w1.T, 0.0)             # (B, Cr)
        return h @ w2.T                            # (B, C)

    out = jax.nn.sigmoid(mlp(avg) + mlp(mx))       # (B, C)
    return out.reshape(B, C, 1, 1)


if __name__ == "__main__":
    def run_case(B, C, H, W, ratio, key, dtype=jnp.float32, tol=1e-5, **kw):
        Cr = max(1, C // ratio)
        kx, k1, k2 = jax.random.split(key, 3)
        x = jax.random.normal(kx, (B, C, H, W), dtype=jnp.float32).astype(dtype)
        # Deterministic "kaiming-ish" init for the two bias-free 1x1 convs.
        w1 = jax.random.normal(k1, (Cr, C), dtype=jnp.float32) * (2.0 / C) ** 0.5
        w2 = jax.random.normal(k2, (C, Cr), dtype=jnp.float32) * (2.0 / Cr) ** 0.5

        out = jax.block_until_ready(channel_attention(x, w1, w2, **kw))
        ref = channel_attention_ref(x, w1, w2)
        assert out.shape == (B, C, 1, 1)
        assert jnp.allclose(out, ref, atol=tol, rtol=tol), (
            f"mismatch vs reference for shape {(B, C, H, W)} dtype {jnp.dtype(dtype).name}")

    key = jax.random.PRNGKey(0)
    k1, k2, k3, k4 = jax.random.split(key, 4)

    # HW = 256 (multiple of 128): single full chunk, no masking, f32 streaming.
    run_case(2, 32, 16, 16, 4, k1)
    # Ragged HW = 100 with native bf16 streaming: single masked trailing chunk.
    run_case(2, 32, 10, 10, 4, k2, dtype=jnp.bfloat16, tol=1e-4)
    # Tiny block budget -> multiple HW chunks + ragged tail (f32): running
    # sum/max accumulation plus last-chunk masking.
    run_case(2, 16, 40, 40, 4, k3, target_block_bytes=64 * 1024)
    # B = 1, bf16, multi-chunk with ragged tail.
    run_case(1, 16, 36, 36, 4, k4, dtype=jnp.bfloat16, tol=1e-4,
             target_block_bytes=32 * 1024)

    print("KERNEL_OK")
</pallas_src>

<mosaic_0001>
module attributes {stable_mosaic.version = 11 : i64} {
  func.func @_channel_attention_kernel(%arg0: i32, %arg1: i32, %arg2: memref<1x32x256xf32, #tpu.memory_space<vmem>>, %arg3: memref<32x8xf32, #tpu.memory_space<vmem>>, %arg4: memref<8x32xf32, #tpu.memory_space<vmem>>, %arg5: memref<1x1x32xf32, #tpu.memory_space<vmem>>, %arg6: memref<32x1xf32, #tpu.memory_space<vmem>>, %arg7: memref<32x1xf32, #tpu.memory_space<vmem>>) attributes {dimension_semantics = [#tpu.dimension_semantics<parallel>, #tpu.dimension_semantics<arbitrary>], iteration_bounds = array<i64: 2, 1>, scalar_prefetch = 0 : i64, scratch_operands = 2 : i64, tpu.core_type = #tpu.core_type<tc>, window_params = [{transform_indices = @transform_0, window_bounds = array<i64: 1, 32, 256>}, {pipeline_mode = #tpu.pipeline_mode<synchronous>, transform_indices = @transform_1, window_bounds = array<i64: 32, 8>}, {pipeline_mode = #tpu.pipeline_mode<synchronous>, transform_indices = @transform_2, window_bounds = array<i64: 8, 32>}, {transform_indices = @transform_3, window_bounds = array<i64: 1, 1, 32>}]} {
    %c0_i32 = arith.constant 0 : i32
    %0 = arith.cmpi eq, %arg1, %c0_i32 : i32
    %1 = arith.extui %0 : i1 to i32
    %c0_i32_0 = arith.constant 0 : i32
    %2 = arith.cmpi ne, %1, %c0_i32_0 : i32
    scf.if %2 {
      %cst_14 = arith.constant 0.000000e+00 : f32
      %18 = vector.broadcast %cst_14 : f32 to vector<32x1xf32>
      %c0_15 = arith.constant 0 : index
      %c0_16 = arith.constant 0 : index
      %19 = vector.load %arg6[%c0_15, %c0_16] : memref<32x1xf32, #tpu.memory_space<vmem>>, vector<32x1xf32>
      tpu.vector_store %arg6[%c0_15, %c0_16], %18 {strides = array<i32>} : memref<32x1xf32, #tpu.memory_space<vmem>>, vector<32x1xf32>,
      %cst_17 = arith.constant 0xFF800000 : f32
      %20 = vector.broadcast %cst_17 : f32 to vector<32x1xf32>
      %c0_18 = arith.constant 0 : index
      %c0_19 = arith.constant 0 : index
      %21 = vector.load %arg7[%c0_18, %c0_19] : memref<32x1xf32, #tpu.memory_space<vmem>>, vector<32x1xf32>
      tpu.vector_store %arg7[%c0_18, %c0_19], %20 {strides = array<i32>} : memref<32x1xf32, #tpu.memory_space<vmem>>, vector<32x1xf32>,
    } else {
    }
    %c0 = arith.constant 0 : index
    %c0_1 = arith.constant 0 : index
    %c0_2 = arith.constant 0 : index
    %3 = vector.load %arg2[%c0, %c0_1, %c0_2] : memref<1x32x256xf32, #tpu.memory_space<vmem>>, vector<1x32x256xf32>
    %4 = vector.shape_cast %3 : vector<1x32x256xf32> to vector<32x256xf32>
    %c0_3 = arith.constant 0 : index
    %c0_4 = arith.constant 0 : index
    %5 = vector.load %arg6[%c0_3, %c0_4] : memref<32x1xf32, #tpu.memory_space<vmem>>, vector<32x1xf32>
    %cst = arith.constant dense<0.000000e+00> : vector<32xf32>
    %6 = vector.multi_reduction <add>, %4, %cst [1] : vector<32x256xf32> to vector<32xf32>
    %7 = vector.shape_cast %6 : vector<32xf32> to vector<32x1xf32>
    %8 = arith.addf %5, %7 : vector<32x1xf32>
    %c0_5 = arith.constant 0 : index
    %c0_6 = arith.constant 0 : index
    %9 = vector.load %arg6[%c0_5, %c0_6] : memref<32x1xf32, #tpu.memory_space<vmem>>, vector<32x1xf32>
    tpu.vector_store %arg6[%c0_5, %c0_6], %8 {strides = array<i32>} : memref<32x1xf32, #tpu.memory_space<vmem>>, vector<32x1xf32>,
    %c0_7 = arith.constant 0 : index
    %c0_8 = arith.constant 0 : index
    %10 = vector.load %arg7[%c0_7, %c0_8] : memref<32x1xf32, #tpu.memory_space<vmem>>, vector<32x1xf32>
    %cst_9 = arith.constant dense<0xFF800000> : vector<32xf32>
    %11 = vector.multi_reduction <maximumf>, %4, %cst_9 [1] : vector<32x256xf32> to vector<32xf32>
    %12 = vector.shape_cast %11 : vector<32xf32> to vector<32x1xf32>
    %13 = arith.maximumf %10, %12 : vector<32x1xf32>
    %c0_10 = arith.constant 0 : index
    %c0_11 = arith.constant 0 : index
    %14 = vector.load %arg7[%c0_10, %c0_11] : memref<32x1xf32, #tpu.memory_space<vmem>>, vector<32x1xf32>
    tpu.vector_store %arg7[%c0_10, %c0_11], %13 {strides = array<i32>} : memref<32x1xf32, #tpu.memory_space<vmem>>, vector<32x1xf32>,
    %c0_i32_12 = arith.constant 0 : i32
    %15 = arith.cmpi eq, %arg1, %c0_i32_12 : i32
    %16 = arith.extui %15 : i1 to i32
    %c0_i32_13 = arith.constant 0 : i32
    %17 = arith.cmpi ne, %16, %c0_i32_13 : i32
    scf.if %17 {
      %c0_14 = arith.constant 0 : index
      %c0_15 = arith.constant 0 : index
      %18 = vector.load %arg6[%c0_14, %c0_15] : memref<32x1xf32, #tpu.memory_space<vmem>>, vector<32x1xf32>
      %cst_16 = arith.constant 3.906250e-03 : f32
      %19 = vector.broadcast %cst_16 : f32 to vector<32x1xf32>
      %20 = arith.mulf %18, %19 : vector<32x1xf32>
      %c0_17 = arith.constant 0 : index
      %c0_18 = arith.constant 0 : index
      %21 = vector.load %arg7[%c0_17, %c0_18] : memref<32x1xf32, #tpu.memory_space<vmem>>, vector<32x1xf32>
      %22 = tpu.concatenate %20, %21 in 1 : vector<32x1xf32>, vector<32x1xf32> -> vector<32x2xf32>
      %23 = tpu.transpose %22, [1, 0] : vector<32x2xf32> -> vector<2x32xf32>
      %c0_19 = arith.constant 0 : index
      %c0_20 = arith.constant 0 : index
      %24 = vector.load %arg3[%c0_19, %c0_20] : memref<32x8xf32, #tpu.memory_space<vmem>>, vector<32x8xf32>
      %cst_21 = arith.constant dense<0.000000e+00> : vector<2x8xf32>
      %25 = tpu.matmul %23, %24, %cst_21 {dimension_numbers = #tpu.dot_dimension_numbers<[1], [0], [0], [1], [0, 0, 1, 1], [], []>} : vector<2x32xf32>, vector<32x8xf32>, vector<2x8xf32> -> vector<2x8xf32>
      %cst_22 = arith.constant 0.000000e+00 : f32
      %26 = vector.broadcast %cst_22 : f32 to vector<2x8xf32>
      %27 = arith.maximumf %25, %26 : vector<2x8xf32>
      %c0_23 = arith.constant 0 : index
      %c0_24 = arith.constant 0 : index
      %28 = vector.load %arg4[%c0_23, %c0_24] : memref<8x32xf32, #tpu.memory_space<vmem>>, vector<8x32xf32>
      %cst_25 = arith.constant dense<0.000000e+00> : vector<2x32xf32>
      %29 = tpu.matmul %27, %28, %cst_25 {dimension_numbers = #tpu.dot_dimension_numbers<[1], [0], [0], [1], [0, 0, 1, 1], [], []>} : vector<2x8xf32>, vector<8x32xf32>, vector<2x32xf32> -> vector<2x32xf32>
      %30 = vector.extract_strided_slice %29 {offsets = [0, 0], sizes = [1, 32], strides = [1, 1]} : vector<2x32xf32> to vector<1x32xf32>
      %31 = vector.extract_strided_slice %29 {offsets = [1, 0], sizes = [1, 32], strides = [1, 1]} : vector<2x32xf32> to vector<1x32xf32>
      %32 = arith.addf %30, %31 : vector<1x32xf32>
      %33 = arith.negf %32 : vector<1x32xf32>
      %34 = math.exp %33 : vector<1x32xf32>
      %cst_26 = arith.constant 1.000000e+00 : f32
      %35 = vector.broadcast %cst_26 : f32 to vector<1x32xf32>
      %36 = arith.addf %35, %34 : vector<1x32xf32>
      %37 = arith.divf %35, %36 : vector<1x32xf32>
      %c0_27 = arith.constant 0 : index
      %c0_28 = arith.constant 0 : index
      %c0_29 = arith.constant 0 : index
      %38 = vector.load %arg5[%c0_27, %c0_28, %c0_29] : memref<1x1x32xf32, #tpu.memory_space<vmem>>, vector<1x1x32xf32>
      %39 = vector.shape_cast %38 : vector<1x1x32xf32> to vector<1x32xf32>
      %40 = vector.shape_cast %37 : vector<1x32xf32> to vector<1x1x32xf32>
      tpu.vector_store %arg5[%c0_27, %c0_28, %c0_29], %40 {strides = array<i32>} : memref<1x1x32xf32, #tpu.memory_space<vmem>>, vector<1x1x32xf32>,
    } else {
    }
    return
  }
  func.func @transform_0(%arg0: i32, %arg1: i32) -> (i32, i32, i32) {
    %c0_i32 = arith.constant 0 : i32
    %c0_i32_0 = arith.constant 0 : i32
    return %arg0, %c0_i32, %arg1 : i32, i32, i32
  }
  func.func @transform_1(%arg0: i32, %arg1: i32) -> (i32, i32) {
    %c0_i32 = arith.constant 0 : i32
    %c0_i32_0 = arith.constant 0 : i32
    %c0_i32_1 = arith.constant 0 : i32
    return %c0_i32, %c0_i32_0 : i32, i32
  }
  func.func @transform_2(%arg0: i32, %arg1: i32) -> (i32, i32) {
    %c0_i32 = arith.constant 0 : i32
    %c0_i32_0 = arith.constant 0 : i32
    %c0_i32_1 = arith.constant 0 : i32
    return %c0_i32, %c0_i32_0 : i32, i32
  }
  func.func @transform_3(%arg0: i32, %arg1: i32) -> (i32, i32, i32) {
    %c0_i32 = arith.constant 0 : i32
    %c0_i32_0 = arith.constant 0 : i32
    %c0_i32_1 = arith.constant 0 : i32
    return %arg0, %c0_i32, %c0_i32_0 : i32, i32, i32
  }
}

</mosaic_0001>

<llo_original>
// kernel: tpu_custom_call.1
$region0: #{tpu_custom_call.1}
  #allocation0 [shape = 'u32[]', space=smem, size = 0x4, offset = 0x4, fixed_abs, tag = 'smem constant byte address 0x4 - core index']
  #allocation1 [shape = 'u32[144,128]{1,0:T(1,128)}', space=vmem, size = 0x12000, scoped, tag = 'internal scratch']
  #allocation2 [shape = 'f32[32,1]{1,0:T(8,128)}', space=vmem, size = 0x4000, scoped, tag = 'scratch operand']
  #allocation3 [shape = 'f32[32,1]{1,0:T(8,128)}', space=vmem, size = 0x4000, scoped, tag = 'scratch operand']
  %s0 = inlined_call_operand.hbm [shape: f32[2,32,256], index: 0, kind: input, shape index: {}]
  %s1 = inlined_call_operand.vmem [shape: f32[32,8], index: 1, kind: input, shape index: {}]
  %s2 = inlined_call_operand.vmem [shape: f32[8,32], index: 2, kind: input, shape index: {}]
  %s3 = inlined_call_operand.hbm [shape: f32[2,1,32], index: 3, kind: output, shape index: {}]
  %s4 = sld [smem:[#allocation0]]
  $region57: #{tpu_custom_call.1} parent=0
    _
  %s6 = ssub.s32 1, %s4
  %s7 = scalar_select 0, %s6, %s4
  $region1: #{tpu_custom_call.1} parent=0
    #allocation4 [shape = 'u8[65536]{0}', space=vmem, size = 0x10000, scoped, tag = 'input window, operand 0']
    #allocation5 [shape = 's32[2]{0}', space=sflag, size = 0x8, scoped, tag = 'scoped memory for tpu_custom_call.1']
    #allocation6 [shape = 's32[2]{0}', space=sflag, size = 0x8, scoped, tag = 'scoped memory for tpu_custom_call.1']
    #allocation7 [shape = 'u8[1024]{0}', space=vmem, size = 0x400, scoped, tag = 'output window, operand 0']
    %8 = vsyncpa [#allocation5], 0
    %s9 = scalar_lea.sflag [#allocation5], 1
    %10 = vsyncpa %s9, 0
    %11 = vsyncpa [#allocation6], 0
    %s12 = scalar_lea.sflag [#allocation6], 1
    %13 = vsyncpa %s12, 0
    loop: start=0, step=1, limit=4
    $region2: #{tpu_custom_call.1} parent=1 // loop_pre_header
      _
    $region3: #{tpu_custom_call.1} parent=1 // loop_header
      %s15 = sphi 0, %s19
      %p16 = scmp.ge.s32.totalorder %s15, 4
      %s22 = sphi 0, %s34
      %s23 = sphi 0, %s30
      %s24 = sphi 0, %s22
      %s25 = sphi 0, %s23
      %s26 = sphi 0, %s24
      %s27 = sphi 0, %s25
      %s39 = sphi 0, %s41
      %s42 = sphi 0, %s39
      %s43 = sphi 0, %s42
      %s59 = sphi 0, %s43
      %s63 = sphi 0, %s63
      %s65 = sphi 0, %s63
      %s66 = sphi 0, %s65
      %s80 = sphi 0, %s66
      %s84 = sphi 0, %s84
      %s86 = sphi 0, %s84
      %s87 = sphi 0, %s86
      %s101 = sphi 0, %s87
      %s107 = sphi 0, %s109
      %s110 = sphi 0, %s107
      %s111 = sphi 0, %s110
      %s127 = sphi 0, %s111
    $region4: #{tpu_custom_call.1} parent=1 // loop_header_branch
      %18 = sbr.rel (%p16) target = $region8
    $region5: #{tpu_custom_call.1} parent=1 // loop_body
      %s20 = ssub.s32 %s15, 1
      %s21 = ssub.s32 %s15, 2
      %s28 = sadd.s32 1, %s23
      %p29 = scmp.ge.s32.totalorder %s28, 1
      %s30 = scalar_select %p29, 0, %s28
      %s31 = sadd.s32 1, %s22
      %s32 = scalar_select %p29, %s31, %s22
      %p33 = scmp.ge.s32.totalorder %s32, 2
      %s34 = scalar_select %p33, 0, %s32
      %s35 = ssub.s32 %s22, %s34
      %s36 = ssub.s32 %s23, %s30
      %s37 = sor.u32 %s35, %s36
      %p38 = scmp.eq.s32.totalorder %s37, 0
      %s40 = sadd.s32 %s39, 1
      %s41 = scalar_select %p38, %s39, %s40
      %p44 = pneg %p38
      %p45 = scmp.eq.s32.totalorder %s15, 1
      %p46 = por %p44, %p45
      %p47 = scmp.ne.s32.totalorder %s39, %s42
      %p48 = scmp.eq.s32.totalorder %s15, 0
      %p49 = por %p47, %p48
      %p50 = scmp.ne.s32.totalorder %s39, %s42
      %p51 = scmp.eq.s32.totalorder %s20, 1
      %p52 = por %p50, %p51
      %p53 = scmp.ne.s32.totalorder %s42, %s43
      %p54 = scmp.eq.s32.totalorder %s20, 0
      %p55 = por %p53, %p54
      %p56 = scmp.ne.s32.totalorder %s42, %s43
      %p57 = scmp.eq.s32.totalorder %s21, 1
      %p58 = por %p56, %p57
      %p60 = scmp.ne.s32.totalorder %s43, %s59
      %p61 = scmp.eq.s32.totalorder %s21, 0
      %p62 = por %p60, %p61
      %s64 = sadd.s32 %s63, 1
      %p67 = scmp.eq.s32.totalorder %s15, 1
      %p68 = scmp.ne.s32.totalorder %s63, %s65
      %p69 = scmp.eq.s32.totalorder %s15, 0
      %p70 = por %p68, %p69
      %p71 = scmp.ne.s32.totalorder %s63, %s65
      %p72 = scmp.eq.s32.totalorder %s20, 1
      %p73 = por %p71, %p72
      %p74 = scmp.ne.s32.totalorder %s65, %s66
      %p75 = scmp.eq.s32.totalorder %s20, 0
      %p76 = por %p74, %p75
      %p77 = scmp.ne.s32.totalorder %s65, %s66
      %p78 = scmp.eq.s32.totalorder %s21, 1
      %p79 = por %p77, %p78
      %p81 = scmp.ne.s32.totalorder %s66, %s80
      %p82 = scmp.eq.s32.totalorder %s21, 0
      %p83 = por %p81, %p82
      %s85 = sadd.s32 %s84, 1
      %p88 = scmp.eq.s32.totalorder %s15, 1
      %p89 = scmp.ne.s32.totalorder %s84, %s86
      %p90 = scmp.eq.s32.totalorder %s15, 0
      %p91 = por %p89, %p90
      %p92 = scmp.ne.s32.totalorder %s84, %s86
      %p93 = scmp.eq.s32.totalorder %s20, 1
      %p94 = por %p92, %p93
      %p95 = scmp.ne.s32.totalorder %s86, %s87
      %p96 = scmp.eq.s32.totalorder %s20, 0
      %p97 = por %p95, %p96
      %p98 = scmp.ne.s32.totalorder %s86, %s87
      %p99 = scmp.eq.s32.totalorder %s21, 1
      %p100 = por %p98, %p99
      %p102 = scmp.ne.s32.totalorder %s87, %s101
      %p103 = scmp.eq.s32.totalorder %s21, 0
      %p104 = por %p102, %p103
      %s105 = ssub.s32 %s22, %s34
      %p106 = scmp.eq.s32.totalorder %s105, 0
      %s108 = sadd.s32 %s107, 1
      %s109 = scalar_select %p106, %s107, %s108
      %p112 = pneg %p106
      %p113 = scmp.eq.s32.totalorder %s15, 1
      %p114 = por %p112, %p113
      %p115 = scmp.ne.s32.totalorder %s107, %s110
      %p116 = scmp.eq.s32.totalorder %s15, 0
      %p117 = por %p115, %p116
      %p118 = scmp.ne.s32.totalorder %s107, %s110
      %p119 = scmp.eq.s32.totalorder %s20, 1
      %p120 = por %p118, %p119
      %p121 = scmp.ne.s32.totalorder %s110, %s111
      %p122 = scmp.eq.s32.totalorder %s20, 0
      %p123 = por %p121, %p122
      %p124 = scmp.ne.s32.totalorder %s110, %s111
      %p125 = scmp.eq.s32.totalorder %s21, 1
      %p126 = por %p124, %p125
      %p128 = scmp.ne.s32.totalorder %s111, %s127
      %p129 = scmp.eq.s32.totalorder %s21, 0
      %p130 = por %p128, %p129
      %p131 = scmp.le.s32.totalorder 1, %s15
      %p132 = scmp.lt.s32.totalorder %s15, 3
      %p133 = pnand %p131, %p132
      %p134 = pneg %p133
      // Predicated region
      $region9: #{tpu_custom_call.1} parent=5 // pred_check
        _
      $region10: #{tpu_custom_call.1} parent=5 // pred_check_branch
        %136 = sbr.rel (%p133) target = $region12
      $region11: #{tpu_custom_call.1} parent=5 // pred_region
        %s137 = ssub.s32 %s15, 1
        // Predicated region
        $region13: #{tpu_custom_call.1} parent=11 // pred_check
          %p138 = pneg %p76
        $region14: #{tpu_custom_call.1} parent=11 // pred_check_branch
          %140 = sbr.rel (%p138) target = $region16
        $region15: #{tpu_custom_call.1} parent=11 // pred_region
          _
        $region16: #{tpu_custom_call.1} parent=11 // pred_fallthru
          _
        // Predicated region
        $region17: #{tpu_custom_call.1} parent=11 // pred_check
          %p141 = pneg %p97
        $region18: #{tpu_custom_call.1} parent=11 // pred_check_branch
          %143 = sbr.rel (%p141) target = $region20
        $region19: #{tpu_custom_call.1} parent=11 // pred_region
          _
        $region20: #{tpu_custom_call.1} parent=11 // pred_fallthru
          _
      $region12: #{tpu_custom_call.1} parent=5 // pred_fallthru
        _
      %p144 = scmp.lt.s32.totalorder %s15, 2
      // Predicated region
      $region21: #{tpu_custom_call.1} parent=5 // pred_check
        %p145 = pneg %p144
      $region22: #{tpu_custom_call.1} parent=5 // pred_check_branch
        %147 = sbr.rel (%p145) target = $region24
      $region23: #{tpu_custom_call.1} parent=5 // pred_region
        // Predicated region
        $region25: #{tpu_custom_call.1} parent=23 // pred_check
          %p148 = pneg %p49
        $region26: #{tpu_custom_call.1} parent=23 // pred_check_branch
          %150 = sbr.rel (%p148) target = $region28
        $region27: #{tpu_custom_call.1} parent=23 // pred_region
          %s151 = sand.u32 %s39, 1
          %s152 = scalar_lea.sflag [#allocation5], %s151
          %s153 = sand.u32 %s39, 1
          %s154 = smul.addr %s153, 64
          %s155 = scalar_lea.vmem [#allocation4], %s154
          %s156 = smul.u32 2, %s23
          %s158 = ssub.s32 1024, 1024
          %159 = vsyncadd %s152, %s158
          %s160 = smul.addr %s22, 8
          %s161 = sadd.s32 %s156, %s160
          %s162 = smul.addr %s161, 128
          %s163 = scalar_lea.hbm %s0, %s162
          %s164 = sshll.u32 %s155, 4
          %s165 = int_to_ptr.vmem [resolvable:$true] %s164
          %170 = dma.hbm_to_vmem [thread:$0]  %s163, 1024, %s165, %s152, 256, 256, 16
        $region28: #{tpu_custom_call.1} parent=23 // pred_fallthru
          _
      $region24: #{tpu_custom_call.1} parent=5 // pred_fallthru
        _
      %p171 = scmp.le.s32.totalorder 1, %s15
      %p172 = scmp.lt.s32.totalorder %s15, 3
      %p173 = pnand %p171, %p172
      %p174 = pneg %p173
      // Predicated region
      $region29: #{tpu_custom_call.1} parent=5 // pred_check
        _
      $region30: #{tpu_custom_call.1} parent=5 // pred_check_branch
        %176 = sbr.rel (%p173) target = $region32
      $region31: #{tpu_custom_call.1} parent=5 // pred_region
        %s177 = ssub.s32 %s15, 1
        %s178 = sand.u32 %s42, 1
        %s179 = scalar_lea.sflag [#allocation5], %s178
        %s180 = sand.u32 %s42, 1
        %s181 = smul.addr %s180, 64
        %s182 = scalar_lea.vmem [#allocation4], %s181
        // Predicated region
        $region33: #{tpu_custom_call.1} parent=31 // pred_check
          %p183 = pneg %p55
        $region34: #{tpu_custom_call.1} parent=31 // pred_check_branch
          %185 = sbr.rel (%p183) target = $region36
        $region35: #{tpu_custom_call.1} parent=31 // pred_region
          %186 = dma.done %s179, 1024
        $region36: #{tpu_custom_call.1} parent=31 // pred_fallthru
          _
        %s187 = sand.u32 %s42, 1
        %s188 = scalar_lea.sflag [#allocation5], %s187
        %s189 = sand.u32 %s42, 1
        %s190 = smul.addr %s189, 64
        %s191 = scalar_lea.vmem [#allocation4], %s190
        %p192 = pneg %p55
        %p193 = pneg %p52
        %p194 = pneg %p76
        %p195 = pneg %p73
        %p196 = pneg %p97
        %p197 = pneg %p94
        %p198 = pneg %p123
        %p199 = pneg %p120
        %s200 = sand.u32 %s110, 1
        %s201 = scalar_lea.sflag [#allocation6], %s200
        %s202 = sand.u32 %s110, 1
        %s203 = scalar_lea.vmem [#allocation7], %s202
        %s204 = smul.u32 2, %s25
        %p205 = scmp.eq.s32.totalorder %s25, 0
        // Predicated region
        $region37: #{tpu_custom_call.1} parent=31 // pred_check
          %p206 = pneg %p205
        $region38: #{tpu_custom_call.1} parent=31 // pred_check_branch
          %208 = sbr.rel (%p206) target = $region40
        $region39: #{tpu_custom_call.1} parent=31 // pred_region
          %vm209 = vcmask 7168
          %210 = vst.msk [vmem:[#allocation2] sm:$0xff] %vm209, 0.0
          %211 = vst.msk [vmem:[#allocation2 + $0x8] sm:$0xff] %vm209, 0.0
          %212 = vst.msk [vmem:[#allocation2 + $0x10] sm:$0xff] %vm209, 0.0
          %213 = vst.msk [vmem:[#allocation2 + $0x18] sm:$0xff] %vm209, 0.0
          %214 = vst.msk [vmem:[#allocation3] sm:$0xff] %vm209, -inf
          %215 = vst.msk [vmem:[#allocation3 + $0x8] sm:$0xff] %vm209, -inf
          %216 = vst.msk [vmem:[#allocation3 + $0x10] sm:$0xff] %vm209, -inf
          %217 = vst.msk [vmem:[#allocation3 + $0x18] sm:$0xff] %vm209, -inf
        $region40: #{tpu_custom_call.1} parent=31 // pred_fallthru
          _
        %v218 = vld [vmem:[%s182] sm:$0xff]
        %v219 = vld [vmem:[%s182 + $0x8] sm:$0xff]
        %v220 = vld [vmem:[%s182 + $0x10] sm:$0xff]
        %v221 = vld [vmem:[%s182 + $0x18] sm:$0xff]
        %v222 = vld [vmem:[%s182 + $0x20] sm:$0xff]
        %v223 = vld [vmem:[%s182 + $0x28] sm:$0xff]
        %v224 = vld [vmem:[%s182 + $0x30] sm:$0xff]
        %v225 = vld [vmem:[%s182 + $0x38] sm:$0xff]
        %v226 = vld [vmem:[#allocation2] sm:$0xff]
        %v227 = vld [vmem:[#allocation2 + $0x8] sm:$0xff]
        %v228 = vld [vmem:[#allocation2 + $0x10] sm:$0xff]
        %v229 = vld [vmem:[#allocation2 + $0x18] sm:$0xff]
        %v230 = vadd.f32 %v218, %v219
        %231 = vadd.xlane.f32.xlu0 %v230
        %v232 = vpop.xlane.xlu0 %231
        %v233 = vadd.f32 %v220, %v221
        %234 = vadd.xlane.f32.xlu0 %v233
        %v235 = vpop.xlane.xlu0 %234
        %v236 = vadd.f32 %v222, %v223
        %237 = vadd.xlane.f32.xlu0 %v236
        %v238 = vpop.xlane.xlu0 %237
        %v239 = vadd.f32 %v224, %v225
        %240 = vadd.xlane.f32.xlu0 %v239
        %v241 = vpop.xlane.xlu0 %240
        %v242 = vadd.f32 %v226, %v232
        %v243 = vadd.f32 %v227, %v235
        %v244 = vadd.f32 %v228, %v238
        %v245 = vadd.f32 %v229, %v241
        %vm246 = vcmask 7168
        %247 = vst.msk [vmem:[#allocation2] sm:$0xff] %vm246, %v242
        %248 = vst.msk [vmem:[#allocation2 + $0x8] sm:$0xff] %vm246, %v243
        %249 = vst.msk [vmem:[#allocation2 + $0x10] sm:$0xff] %vm246, %v244
        %250 = vst.msk [vmem:[#allocation2 + $0x18] sm:$0xff] %vm246, %v245
        %v251 = vld [vmem:[#allocation3] sm:$0xff]
        %v252 = vld [vmem:[#allocation3 + $0x8] sm:$0xff]
        %v253 = vld [vmem:[#allocation3 + $0x10] sm:$0xff]
        %v254 = vld [vmem:[#allocation3 + $0x18] sm:$0xff]
        %v255 = vmax.f32 %v218, %v219
        %256 = vmax.xlane.f32.xlu0 %v255
        %v257 = vpop.xlane.xlu0 %256
        %v258 = vmax.f32 %v220, %v221
        %259 = vmax.xlane.f32.xlu0 %v258
        %v260 = vpop.xlane.xlu0 %259
        %v261 = vmax.f32 %v222, %v223
        %262 = vmax.xlane.f32.xlu0 %v261
        %v263 = vpop.xlane.xlu0 %262
        %v264 = vmax.f32 %v224, %v225
        %265 = vmax.xlane.f32.xlu0 %v264
        %v266 = vpop.xlane.xlu0 %265
        %v267 = vmax.f32 %v251, %v257
        %v268 = vmax.f32 %v252, %v260
        %v269 = vmax.f32 %v253, %v263
        %v270 = vmax.f32 %v254, %v266
        %271 = vst.msk [vmem:[#allocation3] sm:$0xff] %vm246, %v267
        %272 = vst.msk [vmem:[#allocation3 + $0x8] sm:$0xff] %vm246, %v268
        %273 = vst.msk [vmem:[#allocation3 + $0x10] sm:$0xff] %vm246, %v269
        %274 = vst.msk [vmem:[#allocation3 + $0x18] sm:$0xff] %vm246, %v270
        // Predicated region
        $region41: #{tpu_custom_call.1} parent=31 // pred_check
          %p275 = pneg %p205
        $region42: #{tpu_custom_call.1} parent=31 // pred_check_branch
          %277 = sbr.rel (%p275) target = $region44
        $region43: #{tpu_custom_call.1} parent=31 // pred_region
          %v278 = vld [vmem:[#allocation2] sm:$0xff]
          %v279 = vld [vmem:[#allocation2 + $0x8] sm:$0xff]
          %v280 = vld [vmem:[#allocation2 + $0x10] sm:$0xff]
          %v281 = vld [vmem:[#allocation2 + $0x18] sm:$0xff]
          %v282 = vmul.f32 %v278, 0.00390625
          %v283 = vmul.f32 %v279, 0.00390625
          %v284 = vmul.f32 %v280, 0.00390625
          %v285 = vmul.f32 %v281, 0.00390625
          %v286 = vld [vmem:[#allocation3] sm:$0xff]
          %v287 = vld [vmem:[#allocation3 + $0x8] sm:$0xff]
          %v288 = vld [vmem:[#allocation3 + $0x10] sm:$0xff]
          %v289 = vld [vmem:[#allocation3 + $0x18] sm:$0xff]
          %294 = vrot.lane.b32.xlu0 %v286, 1
          %v295 = vpop.permute.xlu0 %294
          %296 = vrot.lane.b32.xlu0 %v287, 1
          %v297 = vpop.permute.xlu0 %296
          %298 = vrot.lane.b32.xlu0 %v288, 1
          %v299 = vpop.permute.xlu0 %298
          %300 = vrot.lane.b32.xlu0 %v289, 1
          %v301 = vpop.permute.xlu0 %300
          %v306 = vsel %vm246, %v282, %v295
          %v307 = vsel %vm246, %v283, %v297
          %v308 = vsel %vm246, %v284, %v299
          %v309 = vsel %vm246, %v285, %v301
          %310 = vxpose.xlu0.b32.start [1/16] %v306, 128
          %311 = vxpose.xlu0.b32.cont [2/16] %v307, 128
          %312 = vxpose.xlu0.b32.cont [3/16] %v308, 128
          %313 = vxpose.xlu0.b32.cont [4/16] %v309, 128
          %314 = vxpose.xlu0.b32.cont [5/16] 0.0, 128
          %315 = vxpose.xlu0.b32.cont [6/16] 0.0, 128
          %316 = vxpose.xlu0.b32.cont [7/16] 0.0, 128
          %317 = vxpose.xlu0.b32.cont [8/16] 0.0, 128
          %318 = vxpose.xlu0.b32.cont [9/16] 0.0, 128
          %319 = vxpose.xlu0.b32.cont [10/16] 0.0, 128
          %320 = vxpose.xlu0.b32.cont [11/16] 0.0, 128
          %321 = vxpose.xlu0.b32.cont [12/16] 0.0, 128
          %322 = vxpose.xlu0.b32.cont [13/16] 0.0, 128
          %323 = vxpose.xlu0.b32.cont [14/16] 0.0, 128
          %324 = vxpose.xlu0.b32.cont [15/16] 0.0, 128
          %325 = vxpose.xlu0.b32.end [16/16] 0.0, 128
          %v326 = vpop.trf.xlu0
          %v327 = vpop.trf.xlu0
          %v328 = vpop.trf.xlu0
          %v329 = vpop.trf.xlu0
          %v330 = vpop.trf.xlu0
          %v331 = vpop.trf.xlu0
          %v332 = vpop.trf.xlu0
          %v333 = vpop.trf.xlu0
          %v334 = vpop.trf.xlu0
          %v335 = vpop.trf.xlu0
          %v336 = vpop.trf.xlu0
          %v337 = vpop.trf.xlu0
          %v338 = vpop.trf.xlu0
          %v339 = vpop.trf.xlu0
          %v340 = vpop.trf.xlu0
          %v341 = vpop.trf.xlu0
          %v342 = vld [vmem:[%s1] sm:$0xff]
          %v343 = vld [vmem:[%s1 + $0x8] sm:$0xff]
          %v344 = vld [vmem:[%s1 + $0x10] sm:$0xff]
          %v345 = vld [vmem:[%s1 + $0x18] sm:$0xff]
          %vm346 = vcmask 261120
          %v348 = vsel %vm346, %v326, 0
          %350 = vmatprep.subr.mxu0 0.0
          %351 = vmatpush1.msra.mxu0 %v342
          %352 = vmatprep.subr.mxu0 0.0
          %353 = vmatpush1.msra.mxu0 %v343
          %354 = vmatprep.subr.mxu0 0.0
          %355 = vmatpush1.msra.mxu0 %v344
          %356 = vmatprep.subr.mxu0 0.0
          %357 = vmatpush1.msra.mxu0 %v345
          %358 = vmatprep.subr.mxu0 0.0
          %359 = vmatpush1.msra.mxu0 0.0
          %360 = vmatprep.subr.mxu0 0.0
          %361 = vmatpush1.msra.mxu0 0.0
          %362 = vmatprep.subr.mxu0 0.0
          %363 = vmatpush1.msra.mxu0 0.0
          %364 = vmatprep.subr.mxu0 0.0
          %365 = vmatpush1.msra.mxu0 0.0
          %366 = vmatprep.subr.mxu0 0.0
          %367 = vmatpush1.msra.mxu0 0.0
          %368 = vmatprep.subr.mxu0 0.0
          %369 = vmatpush1.msra.mxu0 0.0
          %370 = vmatprep.subr.mxu0 0.0
          %371 = vmatpush1.msra.mxu0 0.0
          %372 = vmatprep.subr.mxu0 0.0
          %373 = vmatpush1.msra.mxu0 0.0
          %374 = vmatprep.subr.mxu0 0.0
          %375 = vmatpush1.msra.mxu0 0.0
          %376 = vmatprep.subr.mxu0 0.0
          %377 = vmatpush1.msra.mxu0 0.0
          %378 = vmatprep.subr.mxu0 0.0
          %379 = vmatpush1.msra.mxu0 0.0
          %380 = vmatprep.subr.mxu0 0.0
          %381 = vmatpush1.msra.mxu0 0.0
          %382 = vmatprep.subr.mxu0 0.0
          %383 = vmatpush1.msra.mxu0 0.0
          %384 = vmatprep.subr.mxu0 0.0
          %385 = vmatpush1.msra.mxu0 0.0
          %386 = vmatprep.subr.mxu0 0.0
          %387 = vmatpush1.msra.mxu0 0.0
          %388 = vmatprep.subr.mxu0 0.0
          %389 = vmatpush1.msra.mxu0 0.0
          %390 = vmatprep.subr.mxu0 0.0
          %391 = vmatpush1.msra.mxu0 0.0
          %392 = vmatprep.subr.mxu0 0.0
          %393 = vmatpush1.msra.mxu0 0.0
          %394 = vmatprep.subr.mxu0 0.0
          %395 = vmatpush1.msra.mxu0 0.0
          %396 = vmatprep.subr.mxu0 0.0
          %397 = vmatpush1.msra.mxu0 0.0
          %398 = vmatprep.subr.mxu0 0.0
          %399 = vmatpush1.msra.mxu0 0.0
          %400 = vmatprep.subr.mxu0 0.0
          %401 = vmatpush1.msra.mxu0 0.0
          %402 = vmatprep.subr.mxu0 0.0
          %403 = vmatpush1.msra.mxu0 0.0
          %404 = vmatprep.subr.mxu0 0.0
          %405 = vmatpush1.msra.mxu0 0.0
          %406 = vmatprep.subr.mxu0 0.0
          %407 = vmatpush1.msra.mxu0 0.0
          %408 = vmatprep.subr.mxu0 0.0
          %409 = vmatpush1.msra.mxu0 0.0
          %410 = vmatprep.subr.mxu0 0.0
          %411 = vmatpush1.msra.mxu0 0.0
          %412 = vmatprep.subr.mxu0 0.0
          %413 = vmatpush1.msra.mxu0 0.0
          %414 = vmatprep.mubr.f32.mxu0 0.0
          %415 = vmatmul.mubr.f32.gmra.mrb[0].mxu0 %v348
          %v416 = vpop.f32.mrb[0].mxu0
          %v417 = vadd.f32 0.0, %v416
          %v418 = vpop.f32.mrb[0].mxu0
          %419 = vdwg.mxu0
          %v420 = vmax.f32 %v417, 0.0
          %v421 = vld [vmem:[%s2] sm:$0xff]
          %vm422 = vcmask 64512
          %v424 = vsel %vm422, %v420, 0
          %426 = vmatprep.subr.mxu0 0.0
          %427 = vmatpush1.msra.mxu0 %v421
          %428 = vmatprep.subr.mxu0 0.0
          %429 = vmatpush1.msra.mxu0 0.0
          %430 = vmatprep.subr.mxu0 0.0
          %431 = vmatpush1.msra.mxu0 0.0
          %432 = vmatprep.subr.mxu0 0.0
          %433 = vmatpush1.msra.mxu0 0.0
          %434 = vmatprep.subr.mxu0 0.0
          %435 = vmatpush1.msra.mxu0 0.0
          %436 = vmatprep.subr.mxu0 0.0
          %437 = vmatpush1.msra.mxu0 0.0
          %438 = vmatprep.subr.mxu0 0.0
          %439 = vmatpush1.msra.mxu0 0.0
          %440 = vmatprep.subr.mxu0 0.0
          %441 = vmatpush1.msra.mxu0 0.0
          %442 = vmatprep.subr.mxu0 0.0
          %443 = vmatpush1.msra.mxu0 0.0
          %444 = vmatprep.subr.mxu0 0.0
          %445 = vmatpush1.msra.mxu0 0.0
          %446 = vmatprep.subr.mxu0 0.0
          %447 = vmatpush1.msra.mxu0 0.0
          %448 = vmatprep.subr.mxu0 0.0
          %449 = vmatpush1.msra.mxu0 0.0
          %450 = vmatprep.subr.mxu0 0.0
          %451 = vmatpush1.msra.mxu0 0.0
          %452 = vmatprep.subr.mxu0 0.0
          %453 = vmatpush1.msra.mxu0 0.0
          %454 = vmatprep.subr.mxu0 0.0
          %455 = vmatpush1.msra.mxu0 0.0
          %456 = vmatprep.subr.mxu0 0.0
          %457 = vmatpush1.msra.mxu0 0.0
          %458 = vmatprep.subr.mxu0 0.0
          %459 = vmatpush1.msra.mxu0 0.0
          %460 = vmatprep.subr.mxu0 0.0
          %461 = vmatpush1.msra.mxu0 0.0
          %462 = vmatprep.subr.mxu0 0.0
          %463 = vmatpush1.msra.mxu0 0.0
          %464 = vmatprep.subr.mxu0 0.0
          %465 = vmatpush1.msra.mxu0 0.0
          %466 = vmatprep.subr.mxu0 0.0
          %467 = vmatpush1.msra.mxu0 0.0
          %468 = vmatprep.subr.mxu0 0.0
          %469 = vmatpush1.msra.mxu0 0.0
          %470 = vmatprep.subr.mxu0 0.0
          %471 = vmatpush1.msra.mxu0 0.0
          %472 = vmatprep.subr.mxu0 0.0
          %473 = vmatpush1.msra.mxu0 0.0
          %474 = vmatprep.subr.mxu0 0.0
          %475 = vmatpush1.msra.mxu0 0.0
          %476 = vmatprep.subr.mxu0 0.0
          %477 = vmatpush1.msra.mxu0 0.0
          %478 = vmatprep.subr.mxu0 0.0
          %479 = vmatpush1.msra.mxu0 0.0
          %480 = vmatprep.subr.mxu0 0.0
          %481 = vmatpush1.msra.mxu0 0.0
          %482 = vmatprep.subr.mxu0 0.0
          %483 = vmatpush1.msra.mxu0 0.0
          %484 = vmatprep.subr.mxu0 0.0
          %485 = vmatpush1.msra.mxu0 0.0
          %486 = vmatprep.subr.mxu0 0.0
          %487 = vmatpush1.msra.mxu0 0.0
          %488 = vmatprep.subr.mxu0 0.0
          %489 = vmatpush1.msra.mxu0 0.0
          %490 = vmatprep.mubr.f32.mxu0 0.0
          %491 = vmatmul.mubr.f32.gmra.mrb[0].mxu0 %v424
          %v492 = vpop.f32.mrb[0].mxu0
          %v493 = vadd.f32 0.0, %v492
          %v494 = vpop.f32.mrb[0].mxu0
          %495 = vdwg.mxu0
          %v497 = vrot.slane %v493, 1
          %v499 = vadd.f32 %v493, %v497
          %v500 = vxor.u32 %v499, 2147483648
          %v501 = vmul.f32 %v500, 1.442695
          %v502 = vpow.pop %v501
          %v503 = vadd.f32 %v502, 1.0
          %v504 = vrcp.pop %v503
          %v505 = vmul.f32 1.0, %v504
          %vm506 = vcmask 253952
          %507 = vst.msk [vmem:[%s203] sm:$0x1] %vm506, %v505
        $region44: #{tpu_custom_call.1} parent=31 // pred_fallthru
          _
        %s508 = sand.u32 %s110, 1
        %s509 = scalar_lea.sflag [#allocation6], %s508
        %s510 = sand.u32 %s110, 1
        %s511 = scalar_lea.vmem [#allocation7], %s510
        // Predicated region
        $region45: #{tpu_custom_call.1} parent=31 // pred_check
          %p512 = pneg %p120
        $region46: #{tpu_custom_call.1} parent=31 // pred_check_branch
          %514 = sbr.rel (%p512) target = $region48
        $region47: #{tpu_custom_call.1} parent=31 // pred_region
          %s516 = ssub.s32 16, 16
          %517 = vsyncadd %s509, %s516
          %s518 = smul.addr %s24, 16
          %s519 = scalar_lea.hbm %s3, %s518
          %s521 = sshll.u32 %s511, 4
          %s522 = int_to_ptr.vmem [resolvable:$true] %s521
          %524 = dma.vmem_to_hbm [thread:$0]  %s522, 16, %s519, %s509
        $region48: #{tpu_custom_call.1} parent=31 // pred_fallthru
          _
      $region32: #{tpu_custom_call.1} parent=5 // pred_fallthru
        _
      %p525 = scmp.le.s32.totalorder 2, %s15
      // Predicated region
      $region49: #{tpu_custom_call.1} parent=5 // pred_check
        %p526 = pneg %p525
      $region50: #{tpu_custom_call.1} parent=5 // pred_check_branch
        %528 = sbr.rel (%p526) target = $region52
      $region51: #{tpu_custom_call.1} parent=5 // pred_region
        %s529 = ssub.s32 %s15, 2
        // Predicated region
        $region53: #{tpu_custom_call.1} parent=51 // pred_check
          %p530 = pneg %p126
        $region54: #{tpu_custom_call.1} parent=51 // pred_check_branch
          %532 = sbr.rel (%p530) target = $region56
        $region55: #{tpu_custom_call.1} parent=51 // pred_region
          %s533 = sand.u32 %s111, 1
          %s534 = scalar_lea.sflag [#allocation6], %s533
          %s535 = sand.u32 %s111, 1
          %s536 = scalar_lea.vmem [#allocation7], %s535
          %537 = dma.done %s534, 16
        $region56: #{tpu_custom_call.1} parent=51 // pred_fallthru
          _
      $region52: #{tpu_custom_call.1} parent=5 // pred_fallthru
        _
    $region6: #{tpu_custom_call.1} parent=1 // loop_footer
      %s19 = sadd.s32 1, %s15
    $region7: #{tpu_custom_call.1} parent=1 // loop_footer_branch
      %14 = sbr.rel target = $region3
    $region8: #{tpu_custom_call.1} parent=1 // loop_exit
      _
    %538 = vsyncpa [#allocation5], 1
    %s539 = scalar_lea.sflag [#allocation5], 1
    %540 = vsyncpa %s539, 1
    %541 = vsyncpa [#allocation6], 1
    %s542 = scalar_lea.sflag [#allocation6], 1
    %543 = vsyncpa %s542, 1

</llo_original>
